<compile_context>
chip_gen: v5e
topology: v5e:2x2
jax: 0.10.0
libtpu: 0.0.40
codegen_flags: <defaults>
</compile_context>

<pallas_src>
from typing import NamedTuple, Optional

import jax
import jax.numpy as jnp
from jax.experimental import pallas as pl
from jax.experimental.pallas import tpu as pltpu


class EncoderOutput(NamedTuple):
    embeddings: Optional[jax.Array] = None


def _hbm_copy_kernel(x_hbm_ref, o_hbm_ref, sem):
    # Pure pass-through: one direct HBM -> HBM DMA of the whole array.
    # No VMEM staging, no tiling constraints, no per-step grid overhead.
    copy = pltpu.make_async_copy(x_hbm_ref, o_hbm_ref, sem)
    copy.start()
    copy.wait()


@jax.jit
def _passthrough(x: jax.Array) -> jax.Array:
    return pl.pallas_call(
        _hbm_copy_kernel,
        out_shape=jax.ShapeDtypeStruct(x.shape, x.dtype),
        in_specs=[pl.BlockSpec(memory_space=pl.ANY)],
        out_specs=pl.BlockSpec(memory_space=pl.ANY),
        scratch_shapes=[pltpu.SemaphoreType.DMA(())],
    )(x)


def encoder_forward(
    input_ids=None,
    attention_mask=None,
    token_type_ids=None,
    position_ids=None,
    head_mask=None,
    labels=None,
    inputs_embeds=None,
    encoder_hidden_states=None,
    encoder_attention_mask=None,
    output_attentions=None,
    output_hidden_states=None,
    return_dict=None,
) -> EncoderOutput:
    """Pallas-backed forward of the abstract Encoder: identity on inputs_embeds.

    Note: all arguments other than `inputs_embeds` are accepted but ignored,
    matching the abstract base class (no masking / attention is applied).
    """
    assert inputs_embeds is not None, "this synthetic Encoder operates on inputs_embeds"
    assert inputs_embeds.ndim == 3, "inputs_embeds must be [batch, seq, hidden]"
    return EncoderOutput(embeddings=_passthrough(inputs_embeds))


if __name__ == "__main__":
    key = jax.random.PRNGKey(0)
    batch, seq, hidden = 2, 8, 32  # arbitrary small shape; DMA path has no alignment needs
    inputs_embeds = jax.random.normal(key, (batch, seq, hidden), dtype=jnp.float32)
    attention_mask = jnp.ones((batch, seq), dtype=jnp.int32)

    result = encoder_forward(inputs_embeds=inputs_embeds, attention_mask=attention_mask)
    emb = jax.block_until_ready(result.embeddings)

    assert emb.shape == (batch, seq, hidden)
    assert emb.dtype == inputs_embeds.dtype
    assert bool(jnp.allclose(emb, inputs_embeds))

    print("KERNEL_OK")
</pallas_src>

<mosaic_0001>
module attributes {stable_mosaic.version = 11 : i64} {
  func.func @_hbm_copy_kernel(%arg0: memref<2x8x32xf32, #tpu.memory_space<any>>, %arg1: memref<2x8x32xf32, #tpu.memory_space<any>>, %arg2: memref<!tpu.dma_semaphore, #tpu.memory_space<semaphore_mem>>) attributes {dimension_semantics = [], scalar_prefetch = 0 : i64, scratch_operands = 1 : i64, tpu.core_type = #tpu.core_type<tc>} {
    tpu.enqueue_dma source(%arg0 : memref<2x8x32xf32, #tpu.memory_space<any>>) target(%arg1 : memref<2x8x32xf32, #tpu.memory_space<any>>) target_semaphore(%arg2 : memref<!tpu.dma_semaphore, #tpu.memory_space<semaphore_mem>>)
    tpu.wait_dma2 semaphore(%arg2 : memref<!tpu.dma_semaphore, #tpu.memory_space<semaphore_mem>>) src(%arg0 : memref<2x8x32xf32, #tpu.memory_space<any>>) dst(%arg1 : memref<2x8x32xf32, #tpu.memory_space<any>>)
    return
  }
}

</mosaic_0001>

<llo_original>
// kernel: _passthrough.1
$region0: #{_passthrough.1}
  #allocation0 [shape = 'u32[]', space=smem, size = 0x4, offset = 0x4, fixed_abs, tag = 'smem constant byte address 0x4 - core index']
  #allocation1 [shape = 'u32[72,128]{1,0:T(1,128)}', space=vmem, size = 0x9000, scoped, tag = 'internal scratch']
  #allocation2 [shape = 's32[1]{0}', space=sflag, size = 0x4, scoped, tag = 'scratch operand']
  #allocation3 [shape = 's32[]', space=sflag, size = 0x4, offset = 0, fixed_abs, tag = 'sflag constant byte address 0x0 - dummy sync flag']
  #allocation4 [shape = 'u32[0]{0}', space=smem, size = 0, offset = 0, fixed_abs, tag = 'smem constant byte address 0x0 - null']
  %s0 = inlined_call_operand.hbm [shape: f32[2,8,32], index: 0, kind: input, shape index: {}]
  %s1 = inlined_call_operand.hbm [shape: f32[2,8,32], index: 1, kind: output, shape index: {}]
  %s2 = sld [smem:[#allocation0]]
  $region2: #{_passthrough.1} parent=0
    _
  %s4 = ssub.s32 1, %s2
  %s5 = scalar_select 0, %s4, %s2
  %s7 = sshll.u32 1, 14
  %s8 = sxor.u32 4294967295, %s7
  %s10 = sshll.u32 %s0, 4
  %s11 = int_to_ptr.hbm [resolvable:$true] %s10
  %s12 = sshll.u32 %s1, 4
  %s13 = int_to_ptr.hbm [resolvable:$true] %s12
  %16 = dma.general %s11, 256, %s13, [#allocation2], [#allocation3], [#allocation4], 0, 0
  %s17 = smul.u32 2, 8
  %s18 = smul.u32 %s17, 1
  %s19 = sshll.u32 %s18, 4
  %20 = dma.done [#allocation2], %s19
  %21 = vsyncmov [#allocation2]
  %s22 = vpop.sfrf %21
  %p23 = scmp.eq.s32.totalorder %s22, 0
  %p24 = pneg %p23
  %26 = shalt.err (%p24)

</llo_original>
